<compile_context>
chip_gen: v7x
topology: tpu7x:2x2x1
jax: 0.10.0
libtpu: 0.0.40
codegen_flags: <defaults>
</compile_context>

<pallas_src>
import functools

import jax
import jax.numpy as jnp
from jax.experimental import pallas as pl
from jax.experimental.pallas import tpu as pltpu


def _round_up(x: int, m: int) -> int:
    return ((x + m - 1) // m) * m


def _vmem_capacity_bytes() -> int:
    try:
        return int(pltpu.get_tpu_info().vmem_capacity_bytes)
    except Exception:
        return 64 * 1024 * 1024  # conservative (v7x per-core VMEM)


# --------------------------------------------------------------------------- #
# Kernel
# --------------------------------------------------------------------------- #
def _gated_attention_kernel(h_ref, wvu_ref, bvu_ref, wa_ref, ba_ref, out_ref,
                            *, Dp: int, compute_dtype):
    # One tile of instances: h_ref is (tile_n, L); weights are full (padded) size.
    h = h_ref[...]
    if h.dtype != compute_dtype:
        h = h.astype(compute_dtype)          # in-kernel cast (no extra HBM pass)

    # Fused V|U projection: one (tile_n, L) @ (L, 2*Dp) matmul, f32 accumulate.
    z = jnp.dot(h, wvu_ref[...], preferred_element_type=jnp.float32)
    z = z + bvu_ref[...]                     # f32 bias add

    # Split on a 128-lane boundary (Dp is a multiple of 128); f32 activations.
    av = jnp.tanh(z[:, :Dp])                 # attention_V branch
    au = jax.nn.sigmoid(z[:, Dp:])           # attention_U branch

    gated = (av * au).astype(wa_ref.dtype)   # cast only for the MXU operand

    # Final projection D -> K (weights padded to Kp lanes for the matmul).
    a = jnp.dot(gated, wa_ref[...], preferred_element_type=jnp.float32)
    a = a + ba_ref[...]

    K = out_ref.shape[-1]
    out_ref[...] = a[:, :K].astype(out_ref.dtype)   # narrow, unpadded writeback


# --------------------------------------------------------------------------- #
# Weight packing (hoist out of the per-forward path when possible)
# --------------------------------------------------------------------------- #
def pack_gated_attention_params(W_V, b_V, W_U, b_U, W_A, b_A,
                                *, compute_dtype=jnp.bfloat16):
    """Pack weights for the kernel.

    Weights are stored as [in, out] (pre-transposed) and biases as [out].
    W_V / W_U are fused into one (L, 2*Dp) matrix (V in lanes [0, D),
    U in lanes [Dp, Dp+D)); zero padding preserves the math exactly.
    """
    cdt = jnp.dtype(compute_dtype)
    L, D = W_V.shape
    K = W_A.shape[1]
    Dp = _round_up(D, 128)
    Kp = _round_up(K, 128)

    W_VU = (jnp.zeros((L, 2 * Dp), cdt)
            .at[:, :D].set(W_V.astype(cdt))
            .at[:, Dp:Dp + D].set(W_U.astype(cdt)))
    b_VU = (jnp.zeros((1, 2 * Dp), jnp.float32)
            .at[0, :D].set(b_V.astype(jnp.float32))
            .at[0, Dp:Dp + D].set(b_U.astype(jnp.float32)))
    W_Ap = jnp.zeros((Dp, Kp), cdt).at[:D, :K].set(W_A.astype(cdt))
    b_Ap = jnp.zeros((1, Kp), jnp.float32).at[0, :K].set(b_A.astype(jnp.float32))
    return (W_VU, b_VU, W_Ap, b_Ap), (D, K)


# --------------------------------------------------------------------------- #
# Apply (H streamed directly from HBM; no padded copy of H is materialized)
# --------------------------------------------------------------------------- #
def gated_attention_apply(H, packed, K, *, tile_n=None, out_dtype=None):
    W_VU, b_VU, W_Ap, b_Ap = packed
    N, L = H.shape
    Dp, Kp = W_Ap.shape
    cdt = W_VU.dtype
    odt = jnp.dtype(H.dtype) if out_dtype is None else jnp.dtype(out_dtype)

    hbytes = jnp.dtype(H.dtype).itemsize
    cbytes = jnp.dtype(cdt).itemsize
    obytes = jnp.dtype(odt).itemsize

    # ----- adaptive instance tile -------------------------------------------
    vmem_cap = _vmem_capacity_bytes()
    budget = int(0.6 * vmem_cap)                       # leave pipeline headroom
    weight_bytes = 2 * (W_VU.size * cbytes + W_Ap.size * cbytes
                        + b_VU.size * 4 + b_Ap.size * 4)   # double-buffered
    per_row = (2 * L * hbytes               # H tile, double-buffered
               + 4 * (2 * Dp) * 4           # f32 intermediates (z/av/au/gated/acc)
               + 2 * max(K, 8) * obytes)    # output tile, double-buffered
    if tile_n is None:
        tile_max = ((budget - weight_bytes) // per_row) // 8 * 8
        tile_max = max(128, min(2048, tile_max))
    else:
        tile_max = max(8, _round_up(int(tile_n), 8))

    # >=2 grid steps whenever there is enough work (v7x megacore sharding),
    # and cap last-tile row padding at < 8 rows (adaptive tiling).
    min_steps = 2 if N >= 16 else 1
    steps = max(min_steps, pl.cdiv(N, tile_max))
    tile = _round_up(pl.cdiv(N, steps), 8)
    grid = (pl.cdiv(N, tile),)

    # ----- generation-aware VMEM limit --------------------------------------
    est = weight_bytes + tile * per_row + (1 << 20)
    vmem_limit = int(min(max(2 * est, 16 * 1024 * 1024), int(0.75 * vmem_cap)))

    out = pl.pallas_call(
        functools.partial(_gated_attention_kernel, Dp=Dp, compute_dtype=cdt),
        out_shape=jax.ShapeDtypeStruct((N, K), odt),
        grid=grid,
        in_specs=[
            # H tile: last block dim == full L (legal even if L % 128 != 0).
            pl.BlockSpec((tile, L), lambda i: (i, 0)),
            pl.BlockSpec((L, 2 * Dp), lambda i: (0, 0)),   # fused W_V | W_U
            pl.BlockSpec((1, 2 * Dp), lambda i: (0, 0)),   # fused b_V | b_U
            pl.BlockSpec((Dp, Kp), lambda i: (0, 0)),      # W_A (padded)
            pl.BlockSpec((1, Kp), lambda i: (0, 0)),       # b_A (padded)
        ],
        out_specs=pl.BlockSpec((tile, K), lambda i: (i, 0)),   # unpadded (N, K)
        compiler_params=pltpu.CompilerParams(
            dimension_semantics=("parallel",),
            vmem_limit_bytes=vmem_limit),
    )(H, W_VU, b_VU, W_Ap, b_Ap)
    return out


def gated_attention_pallas(H, W_V, b_V, W_U, b_U, W_A, b_A,
                           *, tile_n=None, compute_dtype=jnp.bfloat16,
                           out_dtype=None):
    """Gated attention forward.  H: (N, L); weights as [in, out], biases [out].

    compute_dtype: MXU operand dtype (default bf16; accumulation is always f32).
    out_dtype: output dtype (default H.dtype).
    """
    packed, (_, K) = pack_gated_attention_params(
        W_V, b_V, W_U, b_U, W_A, b_A, compute_dtype=compute_dtype)
    return gated_attention_apply(H, packed, K, tile_n=tile_n, out_dtype=out_dtype)


# --------------------------------------------------------------------------- #
# Self-test
# --------------------------------------------------------------------------- #
def _init_linear(key, fan_in, fan_out, dtype=jnp.float32):
    """Mimics torch.nn.Linear default init (U[-1/sqrt(in), 1/sqrt(in)]).
    Returned weight is [in, out] (already transposed for row-major matmul)."""
    kw, kb = jax.random.split(key)
    bound = 1.0 / jnp.sqrt(fan_in)
    W = jax.random.uniform(kw, (fan_in, fan_out), dtype, -bound, bound)
    b = jax.random.uniform(kb, (fan_out,), dtype, -bound, bound)
    return W, b


def _reference(H, W_V, b_V, W_U, b_U, W_A, b_A):
    av = jnp.tanh(H @ W_V + b_V)
    au = jax.nn.sigmoid(H @ W_U + b_U)
    return (av * au) @ W_A + b_A


if __name__ == "__main__":
    # Small shapes consistent with GatedAttentionLayer(L=32, D=16, K=4),
    # applied to a bag of N=16 instances: H has shape (N, L).
    N, L, D, K = 16, 32, 16, 4

    key = jax.random.PRNGKey(0)
    k_h, k_v, k_u, k_a = jax.random.split(key, 4)

    H = jax.random.normal(k_h, (N, L), jnp.float32)
    W_V, b_V = _init_linear(k_v, L, D)   # attention_V Linear(L, D)
    W_U, b_U = _init_linear(k_u, L, D)   # attention_U Linear(L, D)
    W_A, b_A = _init_linear(k_a, D, K)   # attention_weights Linear(D, K)

    ref = _reference(H, W_V, b_V, W_U, b_U, W_A, b_A)

    # f32 compute path: exact check against the reference.
    out_f32 = gated_attention_pallas(H, W_V, b_V, W_U, b_U, W_A, b_A,
                                     compute_dtype=jnp.float32)
    out_f32 = jax.block_until_ready(out_f32)
    assert out_f32.shape == (N, K)
    assert jnp.allclose(out_f32, ref, atol=1e-5, rtol=1e-5), "f32 mismatch"

    # Default (bf16 MXU operands, f32 accumulate): looser tolerance.
    out_bf16 = gated_attention_pallas(H, W_V, b_V, W_U, b_U, W_A, b_A)
    out_bf16 = jax.block_until_ready(out_bf16)
    assert out_bf16.shape == (N, K)
    assert jnp.allclose(out_bf16, ref, atol=5e-2, rtol=5e-2), "bf16 mismatch"

    print("KERNEL_OK")
</pallas_src>

<mosaic_0001>
module attributes {stable_mosaic.version = 11 : i64} {
  func.func @_gated_attention_kernel(%arg0: i32, %arg1: memref<8x32xf32, #tpu.memory_space<vmem>>, %arg2: memref<32x256xf32, #tpu.memory_space<vmem>>, %arg3: memref<1x256xf32, #tpu.memory_space<vmem>>, %arg4: memref<128x128xf32, #tpu.memory_space<vmem>>, %arg5: memref<1x128xf32, #tpu.memory_space<vmem>>, %arg6: memref<8x4xf32, #tpu.memory_space<vmem>>) attributes {dimension_semantics = [#tpu.dimension_semantics<parallel>], iteration_bounds = array<i64: 2>, scalar_prefetch = 0 : i64, scratch_operands = 0 : i64, tpu.core_type = #tpu.core_type<tc>, window_params = [{transform_indices = @transform_0, window_bounds = array<i64: 8, 32>}, {pipeline_mode = #tpu.pipeline_mode<synchronous>, transform_indices = @transform_1, window_bounds = array<i64: 32, 256>}, {pipeline_mode = #tpu.pipeline_mode<synchronous>, transform_indices = @transform_2, window_bounds = array<i64: 1, 256>}, {pipeline_mode = #tpu.pipeline_mode<synchronous>, transform_indices = @transform_3, window_bounds = array<i64: 128, 128>}, {pipeline_mode = #tpu.pipeline_mode<synchronous>, transform_indices = @transform_4, window_bounds = array<i64: 1, 128>}, {transform_indices = @transform_5, window_bounds = array<i64: 8, 4>}]} {
    %c0 = arith.constant 0 : index
    %c0_0 = arith.constant 0 : index
    %0 = vector.load %arg1[%c0, %c0_0] : memref<8x32xf32, #tpu.memory_space<vmem>>, vector<8x32xf32>
    %c0_1 = arith.constant 0 : index
    %c0_2 = arith.constant 0 : index
    %1 = vector.load %arg2[%c0_1, %c0_2] : memref<32x256xf32, #tpu.memory_space<vmem>>, vector<32x256xf32>
    %cst = arith.constant dense<0.000000e+00> : vector<8x256xf32>
    %2 = tpu.matmul %0, %1, %cst {dimension_numbers = #tpu.dot_dimension_numbers<[1], [0], [0], [1], [0, 0, 1, 1], [], []>} : vector<8x32xf32>, vector<32x256xf32>, vector<8x256xf32> -> vector<8x256xf32>
    %c0_3 = arith.constant 0 : index
    %c0_4 = arith.constant 0 : index
    %3 = vector.load %arg3[%c0_3, %c0_4] : memref<1x256xf32, #tpu.memory_space<vmem>>, vector<1x256xf32>
    %4 = vector.broadcast %3 : vector<1x256xf32> to vector<8x256xf32>
    %5 = arith.addf %2, %4 : vector<8x256xf32>
    %6 = vector.extract_strided_slice %5 {offsets = [0, 0], sizes = [8, 128], strides = [1, 1]} : vector<8x256xf32> to vector<8x128xf32>
    %7 = math.tanh %6 : vector<8x128xf32>
    %8 = vector.extract_strided_slice %5 {offsets = [0, 128], sizes = [8, 128], strides = [1, 1]} : vector<8x256xf32> to vector<8x128xf32>
    %9 = arith.negf %8 : vector<8x128xf32>
    %10 = math.exp %9 : vector<8x128xf32>
    %cst_5 = arith.constant 1.000000e+00 : f32
    %11 = vector.broadcast %cst_5 : f32 to vector<8x128xf32>
    %12 = arith.addf %11, %10 : vector<8x128xf32>
    %13 = arith.divf %11, %12 : vector<8x128xf32>
    %14 = arith.mulf %7, %13 : vector<8x128xf32>
    %c0_6 = arith.constant 0 : index
    %c0_7 = arith.constant 0 : index
    %15 = vector.load %arg4[%c0_6, %c0_7] : memref<128x128xf32, #tpu.memory_space<vmem>>, vector<128x128xf32>
    %cst_8 = arith.constant dense<0.000000e+00> : vector<8x128xf32>
    %16 = tpu.matmul %14, %15, %cst_8 {dimension_numbers = #tpu.dot_dimension_numbers<[1], [0], [0], [1], [0, 0, 1, 1], [], []>} : vector<8x128xf32>, vector<128x128xf32>, vector<8x128xf32> -> vector<8x128xf32>
    %c0_9 = arith.constant 0 : index
    %c0_10 = arith.constant 0 : index
    %17 = vector.load %arg5[%c0_9, %c0_10] : memref<1x128xf32, #tpu.memory_space<vmem>>, vector<1x128xf32>
    %18 = vector.broadcast %17 : vector<1x128xf32> to vector<8x128xf32>
    %19 = arith.addf %16, %18 : vector<8x128xf32>
    %20 = vector.extract_strided_slice %19 {offsets = [0, 0], sizes = [8, 4], strides = [1, 1]} : vector<8x128xf32> to vector<8x4xf32>
    %c0_11 = arith.constant 0 : index
    %c0_12 = arith.constant 0 : index
    %21 = vector.load %arg6[%c0_11, %c0_12] : memref<8x4xf32, #tpu.memory_space<vmem>>, vector<8x4xf32>
    tpu.vector_store %arg6[%c0_11, %c0_12], %20 {strides = array<i32>} : memref<8x4xf32, #tpu.memory_space<vmem>>, vector<8x4xf32>,
    return
  }
  func.func @transform_0(%arg0: i32) -> (i32, i32) {
    %c0_i32 = arith.constant 0 : i32
    %c0_i32_0 = arith.constant 0 : i32
    return %arg0, %c0_i32 : i32, i32
  }
  func.func @transform_1(%arg0: i32) -> (i32, i32) {
    %c0_i32 = arith.constant 0 : i32
    %c0_i32_0 = arith.constant 0 : i32
    %c0_i32_1 = arith.constant 0 : i32
    return %c0_i32, %c0_i32_0 : i32, i32
  }
  func.func @transform_2(%arg0: i32) -> (i32, i32) {
    %c0_i32 = arith.constant 0 : i32
    %c0_i32_0 = arith.constant 0 : i32
    %c0_i32_1 = arith.constant 0 : i32
    return %c0_i32, %c0_i32_0 : i32, i32
  }
  func.func @transform_3(%arg0: i32) -> (i32, i32) {
    %c0_i32 = arith.constant 0 : i32
    %c0_i32_0 = arith.constant 0 : i32
    %c0_i32_1 = arith.constant 0 : i32
    return %c0_i32, %c0_i32_0 : i32, i32
  }
  func.func @transform_4(%arg0: i32) -> (i32, i32) {
    %c0_i32 = arith.constant 0 : i32
    %c0_i32_0 = arith.constant 0 : i32
    %c0_i32_1 = arith.constant 0 : i32
    return %c0_i32, %c0_i32_0 : i32, i32
  }
  func.func @transform_5(%arg0: i32) -> (i32, i32) {
    %c0_i32 = arith.constant 0 : i32
    %c0_i32_0 = arith.constant 0 : i32
    return %arg0, %c0_i32 : i32, i32
  }
}

</mosaic_0001>

<llo_original>
// kernel: tpu_custom_call.1
$region0: #{tpu_custom_call.1}
  #allocation0 [shape = 'u32[]', space=smem, size = 0x4, offset = 0x4, fixed_abs, tag = 'smem constant byte address 0x4 - core index']
  #allocation1 [shape = 'u32[144,128]{1,0:T(1,128)}', space=vmem, size = 0x12000, scoped, tag = 'internal scratch']
  %s0 = inlined_call_operand.hbm [shape: f32[16,32], index: 0, kind: input, shape index: {}]
  %s1 = inlined_call_operand.hbm [shape: f32[32,256], index: 1, kind: input, shape index: {}]
  %s2 = inlined_call_operand.vmem [shape: f32[1,256], index: 2, kind: input, shape index: {}]
  %s3 = inlined_call_operand.hbm [shape: f32[128,128], index: 3, kind: input, shape index: {}]
  %s4 = inlined_call_operand.vmem [shape: f32[1,128], index: 4, kind: input, shape index: {}]
  %s5 = inlined_call_operand.vmem [shape: f32[16,4], index: 5, kind: output, shape index: {}]
  %s6 = sld [smem:[#allocation0]]
  $region65: #{tpu_custom_call.1} parent=0
    _
  %s8 = ssub.s32 1, %s6
  %s9 = scalar_select 0, %s8, %s6
  $region1: #{tpu_custom_call.1} parent=0
    #allocation2 [shape = 'u8[8192]{0}', space=vmem, size = 0x2000, scoped, tag = 'input window, operand 0']
    #allocation3 [shape = 's32[2]{0}', space=sflag, size = 0x8, scoped, tag = 'scoped memory for tpu_custom_call.1']
    #allocation4 [shape = 'u8[32768]{0}', space=vmem, size = 0x8000, scoped, tag = 'input window, operand 1, single buffered']
    #allocation5 [shape = 's32[1]{0}', space=sflag, size = 0x4, scoped, tag = 'scoped memory for tpu_custom_call.1']
    #allocation6 [shape = 'u8[65536]{0}', space=vmem, size = 0x10000, scoped, tag = 'input window, operand 3, single buffered']
    %10 = vsyncpa [#allocation3], 0
    %s11 = scalar_lea.sflag [#allocation3], 1
    %12 = vsyncpa %s11, 0
    %13 = vsyncpa [#allocation5], 0
    loop: start=0, step=1, limit=4
    $region2: #{tpu_custom_call.1} parent=1 // loop_pre_header
      _
    $region3: #{tpu_custom_call.1} parent=1 // loop_header
      %s15 = sphi 0, %s19
      %p16 = scmp.ge.s32.totalorder %s15, 4
      %s25 = sphi 0, %s27
      %s28 = sphi 0, %s25
      %s29 = sphi 0, %s28
      %s45 = sphi 0, %s29
      %s49 = sphi 0, %s49
      %s51 = sphi 0, %s49
      %s52 = sphi 0, %s51
      %s66 = sphi 0, %s52
      %s70 = sphi 0, %s70
      %s72 = sphi 0, %s70
      %s73 = sphi 0, %s72
      %s87 = sphi 0, %s73
      %s91 = sphi 0, %s91
      %s93 = sphi 0, %s91
      %s94 = sphi 0, %s93
      %s108 = sphi 0, %s94
      %s112 = sphi 0, %s112
      %s114 = sphi 0, %s112
      %s115 = sphi 0, %s114
      %s129 = sphi 0, %s115
      %s135 = sphi 0, %s137
      %s138 = sphi 0, %s135
      %s139 = sphi 0, %s138
      %s155 = sphi 0, %s139
    $region4: #{tpu_custom_call.1} parent=1 // loop_header_branch
      %18 = sbr.rel (%p16) target = $region8
    $region5: #{tpu_custom_call.1} parent=1 // loop_body
      %s20 = ssub.s32 %s15, 1
      %s21 = ssub.s32 %s15, 2
      %s22 = sadd.s32 %s15, 1
      %s23 = ssub.s32 %s15, %s22
      %p24 = scmp.eq.s32.totalorder %s23, 0
      %s26 = sadd.s32 %s25, 1
      %s27 = scalar_select %p24, %s25, %s26
      %p30 = pneg %p24
      %p31 = scmp.eq.s32.totalorder %s15, 1
      %p32 = por %p30, %p31
      %p33 = scmp.ne.s32.totalorder %s25, %s28
      %p34 = scmp.eq.s32.totalorder %s15, 0
      %p35 = por %p33, %p34
      %p36 = scmp.ne.s32.totalorder %s25, %s28
      %p37 = scmp.eq.s32.totalorder %s20, 1
      %p38 = por %p36, %p37
      %p39 = scmp.ne.s32.totalorder %s28, %s29
      %p40 = scmp.eq.s32.totalorder %s20, 0
      %p41 = por %p39, %p40
      %p42 = scmp.ne.s32.totalorder %s28, %s29
      %p43 = scmp.eq.s32.totalorder %s21, 1
      %p44 = por %p42, %p43
      %p46 = scmp.ne.s32.totalorder %s29, %s45
      %p47 = scmp.eq.s32.totalorder %s21, 0
      %p48 = por %p46, %p47
      %s50 = sadd.s32 %s49, 1
      %p53 = scmp.eq.s32.totalorder %s15, 1
      %p54 = scmp.ne.s32.totalorder %s49, %s51
      %p55 = scmp.eq.s32.totalorder %s15, 0
      %p56 = por %p54, %p55
      %p57 = scmp.ne.s32.totalorder %s49, %s51
      %p58 = scmp.eq.s32.totalorder %s20, 1
      %p59 = por %p57, %p58
      %p60 = scmp.ne.s32.totalorder %s51, %s52
      %p61 = scmp.eq.s32.totalorder %s20, 0
      %p62 = por %p60, %p61
      %p63 = scmp.ne.s32.totalorder %s51, %s52
      %p64 = scmp.eq.s32.totalorder %s21, 1
      %p65 = por %p63, %p64
      %p67 = scmp.ne.s32.totalorder %s52, %s66
      %p68 = scmp.eq.s32.totalorder %s21, 0
      %p69 = por %p67, %p68
      %s71 = sadd.s32 %s70, 1
      %p74 = scmp.eq.s32.totalorder %s15, 1
      %p75 = scmp.ne.s32.totalorder %s70, %s72
      %p76 = scmp.eq.s32.totalorder %s15, 0
      %p77 = por %p75, %p76
      %p78 = scmp.ne.s32.totalorder %s70, %s72
      %p79 = scmp.eq.s32.totalorder %s20, 1
      %p80 = por %p78, %p79
      %p81 = scmp.ne.s32.totalorder %s72, %s73
      %p82 = scmp.eq.s32.totalorder %s20, 0
      %p83 = por %p81, %p82
      %p84 = scmp.ne.s32.totalorder %s72, %s73
      %p85 = scmp.eq.s32.totalorder %s21, 1
      %p86 = por %p84, %p85
      %p88 = scmp.ne.s32.totalorder %s73, %s87
      %p89 = scmp.eq.s32.totalorder %s21, 0
      %p90 = por %p88, %p89
      %s92 = sadd.s32 %s91, 1
      %p95 = scmp.eq.s32.totalorder %s15, 1
      %p96 = scmp.ne.s32.totalorder %s91, %s93
      %p97 = scmp.eq.s32.totalorder %s15, 0
      %p98 = por %p96, %p97
      %p99 = scmp.ne.s32.totalorder %s91, %s93
      %p100 = scmp.eq.s32.totalorder %s20, 1
      %p101 = por %p99, %p100
      %p102 = scmp.ne.s32.totalorder %s93, %s94
      %p103 = scmp.eq.s32.totalorder %s20, 0
      %p104 = por %p102, %p103
      %p105 = scmp.ne.s32.totalorder %s93, %s94
      %p106 = scmp.eq.s32.totalorder %s21, 1
      %p107 = por %p105, %p106
      %p109 = scmp.ne.s32.totalorder %s94, %s108
      %p110 = scmp.eq.s32.totalorder %s21, 0
      %p111 = por %p109, %p110
      %s113 = sadd.s32 %s112, 1
      %p116 = scmp.eq.s32.totalorder %s15, 1
      %p117 = scmp.ne.s32.totalorder %s112, %s114
      %p118 = scmp.eq.s32.totalorder %s15, 0
      %p119 = por %p117, %p118
      %p120 = scmp.ne.s32.totalorder %s112, %s114
      %p121 = scmp.eq.s32.totalorder %s20, 1
      %p122 = por %p120, %p121
      %p123 = scmp.ne.s32.totalorder %s114, %s115
      %p124 = scmp.eq.s32.totalorder %s20, 0
      %p125 = por %p123, %p124
      %p126 = scmp.ne.s32.totalorder %s114, %s115
      %p127 = scmp.eq.s32.totalorder %s21, 1
      %p128 = por %p126, %p127
      %p130 = scmp.ne.s32.totalorder %s115, %s129
      %p131 = scmp.eq.s32.totalorder %s21, 0
      %p132 = por %p130, %p131
      %s133 = ssub.s32 %s15, %s22
      %p134 = scmp.eq.s32.totalorder %s133, 0
      %s136 = sadd.s32 %s135, 1
      %s137 = scalar_select %p134, %s135, %s136
      %p140 = pneg %p134
      %p141 = scmp.eq.s32.totalorder %s15, 1
      %p142 = por %p140, %p141
      %p143 = scmp.ne.s32.totalorder %s135, %s138
      %p144 = scmp.eq.s32.totalorder %s15, 0
      %p145 = por %p143, %p144
      %p146 = scmp.ne.s32.totalorder %s135, %s138
      %p147 = scmp.eq.s32.totalorder %s20, 1
      %p148 = por %p146, %p147
      %p149 = scmp.ne.s32.totalorder %s138, %s139
      %p150 = scmp.eq.s32.totalorder %s20, 0
      %p151 = por %p149, %p150
      %p152 = scmp.ne.s32.totalorder %s138, %s139
      %p153 = scmp.eq.s32.totalorder %s21, 1
      %p154 = por %p152, %p153
      %p156 = scmp.ne.s32.totalorder %s139, %s155
      %p157 = scmp.eq.s32.totalorder %s21, 0
      %p158 = por %p156, %p157
      %p159 = scmp.le.s32.totalorder 1, %s15
      %p160 = scmp.lt.s32.totalorder %s15, 3
      %p161 = pnand %p159, %p160
      %p162 = pneg %p161
      // Predicated region
      $region9: #{tpu_custom_call.1} parent=5 // pred_check
        _
      $region10: #{tpu_custom_call.1} parent=5 // pred_check_branch
        %164 = sbr.rel (%p161) target = $region12
      $region11: #{tpu_custom_call.1} parent=5 // pred_region
        %s165 = ssub.s32 %s15, 1
        // Predicated region
        $region13: #{tpu_custom_call.1} parent=11 // pred_check
          %p166 = pneg %p62
        $region14: #{tpu_custom_call.1} parent=11 // pred_check_branch
          %168 = sbr.rel (%p166) target = $region16
        $region15: #{tpu_custom_call.1} parent=11 // pred_region
          %s170 = ssub.s32 1024, 1024
          %171 = vsyncadd [#allocation5], %s170
          %s172 = sshll.u32 [#allocation4], 4
          %s173 = int_to_ptr.vmem [resolvable:$true] %s172
          %178 = dma.hbm_to_vmem [thread:$0]  %s1, 1024, %s173, [#allocation5], 256, 256, 16
        $region16: #{tpu_custom_call.1} parent=11 // pred_fallthru
          _
        // Predicated region
        $region17: #{tpu_custom_call.1} parent=11 // pred_check
          %p179 = pneg %p83
        $region18: #{tpu_custom_call.1} parent=11 // pred_check_branch
          %181 = sbr.rel (%p179) target = $region20
        $region19: #{tpu_custom_call.1} parent=11 // pred_region
          _
        $region20: #{tpu_custom_call.1} parent=11 // pred_fallthru
          _
        // Predicated region
        $region21: #{tpu_custom_call.1} parent=11 // pred_check
          %p182 = pneg %p104
        $region22: #{tpu_custom_call.1} parent=11 // pred_check_branch
          %184 = sbr.rel (%p182) target = $region24
        $region23: #{tpu_custom_call.1} parent=11 // pred_region
          %s186 = ssub.s32 2048, 2048
          %187 = vsyncadd [#allocation5], %s186
          %s188 = sshll.u32 [#allocation6], 4
          %s189 = int_to_ptr.vmem [resolvable:$true] %s188
          %194 = dma.hbm_to_vmem [thread:$0]  %s3, 2048, %s189, [#allocation5], 128, 128, 8
        $region24: #{tpu_custom_call.1} parent=11 // pred_fallthru
          _
        // Predicated region
        $region25: #{tpu_custom_call.1} parent=11 // pred_check
          %p195 = pneg %p125
        $region26: #{tpu_custom_call.1} parent=11 // pred_check_branch
          %197 = sbr.rel (%p195) target = $region28
        $region27: #{tpu_custom_call.1} parent=11 // pred_region
          _
        $region28: #{tpu_custom_call.1} parent=11 // pred_fallthru
          _
      $region12: #{tpu_custom_call.1} parent=5 // pred_fallthru
        _
      %p198 = scmp.lt.s32.totalorder %s15, 2
      // Predicated region
      $region29: #{tpu_custom_call.1} parent=5 // pred_check
        %p199 = pneg %p198
      $region30: #{tpu_custom_call.1} parent=5 // pred_check_branch
        %201 = sbr.rel (%p199) target = $region32
      $region31: #{tpu_custom_call.1} parent=5 // pred_region
        // Predicated region
        $region33: #{tpu_custom_call.1} parent=31 // pred_check
          %p202 = pneg %p35
        $region34: #{tpu_custom_call.1} parent=31 // pred_check_branch
          %204 = sbr.rel (%p202) target = $region36
        $region35: #{tpu_custom_call.1} parent=31 // pred_region
          %s205 = sand.u32 %s25, 1
          %s206 = scalar_lea.sflag [#allocation3], %s205
          %s207 = sand.u32 %s25, 1
          %s208 = smul.addr %s207, 8
          %s209 = scalar_lea.vmem [#allocation2], %s208
          %s211 = ssub.s32 128, 128
          %212 = vsyncadd %s206, %s211
          %s213 = smul.addr %s15, 128
          %s214 = scalar_lea.hbm %s0, %s213
          %s216 = sshll.u32 %s209, 4
          %s217 = int_to_ptr.vmem [resolvable:$true] %s216
          %219 = dma.hbm_to_vmem [thread:$0]  %s214, 128, %s217, %s206
        $region36: #{tpu_custom_call.1} parent=31 // pred_fallthru
          _
      $region32: #{tpu_custom_call.1} parent=5 // pred_fallthru
        _
      %p220 = scmp.le.s32.totalorder 1, %s15
      %p221 = scmp.lt.s32.totalorder %s15, 3
      %p222 = pnand %p220, %p221
      %p223 = pneg %p222
      // Predicated region
      $region37: #{tpu_custom_call.1} parent=5 // pred_check
        _
      $region38: #{tpu_custom_call.1} parent=5 // pred_check_branch
        %225 = sbr.rel (%p222) target = $region40
      $region39: #{tpu_custom_call.1} parent=5 // pred_region
        %s226 = ssub.s32 %s15, 1
        %s227 = sand.u32 %s28, 1
        %s228 = scalar_lea.sflag [#allocation3], %s227
        %s229 = sand.u32 %s28, 1
        %s230 = smul.addr %s229, 8
        %s231 = scalar_lea.vmem [#allocation2], %s230
        // Predicated region
        $region41: #{tpu_custom_call.1} parent=39 // pred_check
          %p232 = pneg %p41
        $region42: #{tpu_custom_call.1} parent=39 // pred_check_branch
          %234 = sbr.rel (%p232) target = $region44
        $region43: #{tpu_custom_call.1} parent=39 // pred_region
          %235 = dma.done %s228, 128
        $region44: #{tpu_custom_call.1} parent=39 // pred_fallthru
          _
        // Predicated region
        $region45: #{tpu_custom_call.1} parent=39 // pred_check
          %p236 = pneg %p62
        $region46: #{tpu_custom_call.1} parent=39 // pred_check_branch
          %238 = sbr.rel (%p236) target = $region48
        $region47: #{tpu_custom_call.1} parent=39 // pred_region
          %239 = dma.done [#allocation5], 1024
        $region48: #{tpu_custom_call.1} parent=39 // pred_fallthru
          _
        // Predicated region
        $region49: #{tpu_custom_call.1} parent=39 // pred_check
          %p240 = pneg %p104
        $region50: #{tpu_custom_call.1} parent=39 // pred_check_branch
          %242 = sbr.rel (%p240) target = $region52
        $region51: #{tpu_custom_call.1} parent=39 // pred_region
          %243 = dma.done [#allocation5], 2048
        $region52: #{tpu_custom_call.1} parent=39 // pred_fallthru
          _
        %s244 = sand.u32 %s28, 1
        %s245 = scalar_lea.sflag [#allocation3], %s244
        %s246 = sand.u32 %s28, 1
        %s247 = smul.addr %s246, 8
        %s248 = scalar_lea.vmem [#allocation2], %s247
        %p249 = pneg %p41
        %p250 = pneg %p38
        %p251 = pneg %p62
        %p252 = pneg %p59
        %p253 = pneg %p83
        %p254 = pneg %p80
        %p255 = pneg %p104
        %p256 = pneg %p101
        %p257 = pneg %p125
        %p258 = pneg %p122
        %p259 = pneg %p151
        %p260 = pneg %p148
        %p261 = scmp.lt.s32.totalorder %s20, 1
        %s262 = scalar_select %p261, %s20, 1
        %s263 = smul.addr %s262, 8
        %s264 = scalar_lea.vmem %s5, %s263
        %p265 = scmp.lt.s32.totalorder %s20, 1
        %s266 = scalar_select %p265, %s20, 1
        %s267 = smul.addr %s266, 8
        %s268 = scalar_lea.vmem %s5, %s267
        %v269 = vld [vmem:[%s231] sm:$0xff]
        %v270 = vld [vmem:[#allocation4] sm:$0xff]
        %v271 = vld [vmem:[#allocation4 + $0x8] sm:$0xff]
        %v272 = vld [vmem:[#allocation4 + $0x10] sm:$0xff]
        %v273 = vld [vmem:[#allocation4 + $0x18] sm:$0xff]
        %v274 = vld [vmem:[#allocation4 + $0x20] sm:$0xff]
        %v275 = vld [vmem:[#allocation4 + $0x28] sm:$0xff]
        %v276 = vld [vmem:[#allocation4 + $0x30] sm:$0xff]
        %v277 = vld [vmem:[#allocation4 + $0x38] sm:$0xff]
        %v278 = vld [vmem:[%s2] sm:$0x3]
        %v280 = vlaneseq
        %v281 = vshrl.u32 %v280, 7
        %v282 = vsub.s32 0, %v281
        %v283 = vrot.slane %v278, %v282
        %v284 = vlaneseq
        %v285 = vshrl.u32 %v284, 7
        %v286 = vsub.s32 1, %v285
        %v287 = vrot.slane %v278, %v286
        %vm290 = vcmask 261120
        %v292 = vsel %vm290, %v269, 0
        %294 = vmatprep.subr.mxu0 %v271
        %295 = vmatpush1.msra.mxu0 %v270
        %296 = vmatprep.subr.mxu0 %v273
        %297 = vmatpush1.msra.mxu0 %v272
        %298 = vmatprep.subr.mxu0 %v275
        %299 = vmatpush1.msra.mxu0 %v274
        %300 = vmatprep.subr.mxu0 %v277
        %301 = vmatpush1.msra.mxu0 %v276
        %302 = vmatprep.subr.mxu0 0.0
        %303 = vmatpush1.msra.mxu0 0.0
        %304 = vmatprep.subr.mxu0 0.0
        %305 = vmatpush1.msra.mxu0 0.0
        %306 = vmatprep.subr.mxu0 0.0
        %307 = vmatpush1.msra.mxu0 0.0
        %308 = vmatprep.subr.mxu0 0.0
        %309 = vmatpush1.msra.mxu0 0.0
        %310 = vmatprep.subr.mxu0 0.0
        %311 = vmatpush1.msra.mxu0 0.0
        %312 = vmatprep.subr.mxu0 0.0
        %313 = vmatpush1.msra.mxu0 0.0
        %314 = vmatprep.subr.mxu0 0.0
        %315 = vmatpush1.msra.mxu0 0.0
        %316 = vmatprep.subr.mxu0 0.0
        %317 = vmatpush1.msra.mxu0 0.0
        %318 = vmatprep.subr.mxu0 0.0
        %319 = vmatpush1.msra.mxu0 0.0
        %320 = vmatprep.subr.mxu0 0.0
        %321 = vmatpush1.msra.mxu0 0.0
        %322 = vmatprep.subr.mxu0 0.0
        %323 = vmatpush1.msra.mxu0 0.0
        %324 = vmatprep.subr.mxu0 0.0
        %325 = vmatpush1.msra.mxu0 0.0
        %326 = vmatprep.subr.mxu0 0.0
        %327 = vmatpush1.msra.mxu0 0.0
        %328 = vmatprep.subr.mxu0 0.0
        %329 = vmatpush1.msra.mxu0 0.0
        %330 = vmatprep.subr.mxu0 0.0
        %331 = vmatpush1.msra.mxu0 0.0
        %332 = vmatprep.subr.mxu0 0.0
        %333 = vmatpush1.msra.mxu0 0.0
        %334 = vmatprep.subr.mxu0 0.0
        %335 = vmatpush1.msra.mxu0 0.0
        %336 = vmatprep.subr.mxu0 0.0
        %337 = vmatpush1.msra.mxu0 0.0
        %338 = vmatprep.subr.mxu0 0.0
        %339 = vmatpush1.msra.mxu0 0.0
        %340 = vmatprep.subr.mxu0 0.0
        %341 = vmatpush1.msra.mxu0 0.0
        %342 = vmatprep.subr.mxu0 0.0
        %343 = vmatpush1.msra.mxu0 0.0
        %344 = vmatprep.subr.mxu0 0.0
        %345 = vmatpush1.msra.mxu0 0.0
        %346 = vmatprep.subr.mxu0 0.0
        %347 = vmatpush1.msra.mxu0 0.0
        %348 = vmatprep.subr.mxu0 0.0
        %349 = vmatpush1.msra.mxu0 0.0
        %350 = vmatprep.subr.mxu0 0.0
        %351 = vmatpush1.msra.mxu0 0.0
        %352 = vmatprep.subr.mxu0 0.0
        %353 = vmatpush1.msra.mxu0 0.0
        %354 = vmatprep.subr.mxu0 0.0
        %355 = vmatpush1.msra.mxu0 0.0
        %356 = vmatprep.subr.mxu0 0.0
        %357 = vmatpush1.msra.mxu0 0.0
        %358 = vmatprep.mubr.f32.mxu0 0.0
        %359 = vmatmul.mubr.f32.gmra.mrb[0].mxu0 %v292
        %v360 = vpop.f32.mrb[0].mxu0
        %v361 = vadd.f32 %v283, %v360
        %v362 = vpop.f32.mrb[0].mxu0
        %v363 = vadd.f32 %v287, %v362
        %364 = vdwg.mxu0
        %v365 = vtanh.pop %v361
        %v366 = vxor.u32 %v363, 2147483648
        %v367 = vmul.f32 %v366, 1.442695
        %v368 = vpow.pop %v367
        %v369 = vadd.f32 %v368, 1.0
        %v370 = vrcp.pop %v369
        %v371 = vmul.f32 1.0, %v370
        %v372 = vmul.f32 %v365, %v371
        %v373 = vld [vmem:[#allocation6] sm:$0xff]
        %v374 = vld [vmem:[#allocation6 + $0x8] sm:$0xff]
        %v375 = vld [vmem:[#allocation6 + $0x10] sm:$0xff]
        %v376 = vld [vmem:[#allocation6 + $0x18] sm:$0xff]
        %v377 = vld [vmem:[#allocation6 + $0x20] sm:$0xff]
        %v378 = vld [vmem:[#allocation6 + $0x28] sm:$0xff]
        %v379 = vld [vmem:[#allocation6 + $0x30] sm:$0xff]
        %v380 = vld [vmem:[#allocation6 + $0x38] sm:$0xff]
        %v381 = vld [vmem:[#allocation6 + $0x40] sm:$0xff]
        %v382 = vld [vmem:[#allocation6 + $0x48] sm:$0xff]
        %v383 = vld [vmem:[#allocation6 + $0x50] sm:$0xff]
        %v384 = vld [vmem:[#allocation6 + $0x58] sm:$0xff]
        %v385 = vld [vmem:[#allocation6 + $0x60] sm:$0xff]
        %v386 = vld [vmem:[#allocation6 + $0x68] sm:$0xff]
        %v387 = vld [vmem:[#allocation6 + $0x70] sm:$0xff]
        %v388 = vld [vmem:[#allocation6 + $0x78] sm:$0xff]
        %v389 = vld [vmem:[%s4] sm:$0x1]
        %v391 = vlaneseq
        %v392 = vshrl.u32 %v391, 7
        %v393 = vsub.s32 0, %v392
        %v394 = vrot.slane %v389, %v393
        %396 = vmatprep.subr.mxu0 0.0
        %397 = vmatpush1.msra.mxu0 %v373
        %398 = vmatprep.subr.mxu0 0.0
        %399 = vmatpush1.msra.mxu0 %v374
        %400 = vmatprep.subr.mxu0 0.0
        %401 = vmatpush1.msra.mxu0 %v375
        %402 = vmatprep.subr.mxu0 0.0
        %403 = vmatpush1.msra.mxu0 %v376
        %404 = vmatprep.subr.mxu0 0.0
        %405 = vmatpush1.msra.mxu0 %v377
        %406 = vmatprep.subr.mxu0 0.0
        %407 = vmatpush1.msra.mxu0 %v378
        %408 = vmatprep.subr.mxu0 0.0
        %409 = vmatpush1.msra.mxu0 %v379
        %410 = vmatprep.subr.mxu0 0.0
        %411 = vmatpush1.msra.mxu0 %v380
        %412 = vmatprep.subr.mxu0 0.0
        %413 = vmatpush1.msra.mxu0 %v381
        %414 = vmatprep.subr.mxu0 0.0
        %415 = vmatpush1.msra.mxu0 %v382
        %416 = vmatprep.subr.mxu0 0.0
        %417 = vmatpush1.msra.mxu0 %v383
        %418 = vmatprep.subr.mxu0 0.0
        %419 = vmatpush1.msra.mxu0 %v384
        %420 = vmatprep.subr.mxu0 0.0
        %421 = vmatpush1.msra.mxu0 %v385
        %422 = vmatprep.subr.mxu0 0.0
        %423 = vmatpush1.msra.mxu0 %v386
        %424 = vmatprep.subr.mxu0 0.0
        %425 = vmatpush1.msra.mxu0 %v387
        %426 = vmatprep.subr.mxu0 0.0
        %427 = vmatpush1.msra.mxu0 %v388
        %428 = vmatprep.subr.mxu0 0.0
        %429 = vmatpush1.msra.mxu0 0.0
        %430 = vmatprep.subr.mxu0 0.0
        %431 = vmatpush1.msra.mxu0 0.0
        %432 = vmatprep.subr.mxu0 0.0
        %433 = vmatpush1.msra.mxu0 0.0
        %434 = vmatprep.subr.mxu0 0.0
        %435 = vmatpush1.msra.mxu0 0.0
        %436 = vmatprep.subr.mxu0 0.0
        %437 = vmatpush1.msra.mxu0 0.0
        %438 = vmatprep.subr.mxu0 0.0
        %439 = vmatpush1.msra.mxu0 0.0
        %440 = vmatprep.subr.mxu0 0.0
        %441 = vmatpush1.msra.mxu0 0.0
        %442 = vmatprep.subr.mxu0 0.0
        %443 = vmatpush1.msra.mxu0 0.0
        %444 = vmatprep.subr.mxu0 0.0
        %445 = vmatpush1.msra.mxu0 0.0
        %446 = vmatprep.subr.mxu0 0.0
        %447 = vmatpush1.msra.mxu0 0.0
        %448 = vmatprep.subr.mxu0 0.0
        %449 = vmatpush1.msra.mxu0 0.0
        %450 = vmatprep.subr.mxu0 0.0
        %451 = vmatpush1.msra.mxu0 0.0
        %452 = vmatprep.subr.mxu0 0.0
        %453 = vmatpush1.msra.mxu0 0.0
        %454 = vmatprep.subr.mxu0 0.0
        %455 = vmatpush1.msra.mxu0 0.0
        %456 = vmatprep.subr.mxu0 0.0
        %457 = vmatpush1.msra.mxu0 0.0
        %458 = vmatprep.subr.mxu0 0.0
        %459 = vmatpush1.msra.mxu0 0.0
        %460 = vmatprep.mubr.f32.mxu0 0.0
        %461 = vmatmul.mubr.f32.gmra.mrb[0].mxu0 %v372
        %v462 = vpop.f32.mrb[0].mxu0
        %v463 = vadd.f32 %v394, %v462
        %v464 = vpop.f32.mrb[0].mxu0
        %465 = vdwg.mxu0
        %vm466 = vcmask 31744
        %467 = vst.msk [vmem:[%s268] sm:$0xff] %vm466, %v463
        %p468 = scmp.lt.s32.totalorder %s20, 1
        %s469 = scalar_select %p468, %s20, 1
        %s470 = smul.addr %s469, 8
        %s471 = scalar_lea.vmem %s5, %s470
        // Predicated region
        $region53: #{tpu_custom_call.1} parent=39 // pred_check
          %p472 = pneg %p148
        $region54: #{tpu_custom_call.1} parent=39 // pred_check_branch
          %474 = sbr.rel (%p472) target = $region56
        $region55: #{tpu_custom_call.1} parent=39 // pred_region
          _
        $region56: #{tpu_custom_call.1} parent=39 // pred_fallthru
          _
      $region40: #{tpu_custom_call.1} parent=5 // pred_fallthru
        _
      %p475 = scmp.le.s32.totalorder 2, %s15
      // Predicated region
      $region57: #{tpu_custom_call.1} parent=5 // pred_check
        %p476 = pneg %p475
      $region58: #{tpu_custom_call.1} parent=5 // pred_check_branch
        %478 = sbr.rel (%p476) target = $region60
      $region59: #{tpu_custom_call.1} parent=5 // pred_region
        %s479 = ssub.s32 %s15, 2
        // Predicated region
        $region61: #{tpu_custom_call.1} parent=59 // pred_check
          %p480 = pneg %p154
        $region62: #{tpu_custom_call.1} parent=59 // pred_check_branch
          %482 = sbr.rel (%p480) target = $region64
        $region63: #{tpu_custom_call.1} parent=59 // pred_region
          %p483 = scmp.lt.s32.totalorder %s21, 1
          %s484 = scalar_select %p483, %s21, 1
          %s485 = smul.addr %s484, 8
          %s486 = scalar_lea.vmem %s5, %s485
        $region64: #{tpu_custom_call.1} parent=59 // pred_fallthru
          _
      $region60: #{tpu_custom_call.1} parent=5 // pred_fallthru
        _
    $region6: #{tpu_custom_call.1} parent=1 // loop_footer
      %s19 = sadd.s32 1, %s15
    $region7: #{tpu_custom_call.1} parent=1 // loop_footer_branch
      %14 = sbr.rel target = $region3
    $region8: #{tpu_custom_call.1} parent=1 // loop_exit
      _
    %487 = vsyncpa [#allocation3], 1
    %s488 = scalar_lea.sflag [#allocation3], 1
    %489 = vsyncpa %s488, 1
    %490 = vsyncpa [#allocation5], 1

</llo_original>
